<compile_context>
chip_gen: v7x
topology: tpu7x:2x2x1
jax: 0.10.0
libtpu: 0.0.40
codegen_flags: <defaults>
</compile_context>

<pallas_src>
import functools

import jax
import jax.numpy as jnp
from jax.experimental import pallas as pl
from jax.experimental.pallas import tpu as pltpu


def _round_up(x, m):
    return (x + m - 1) // m * m


def fnn_kernel(x_ref, w1_ref, b1_ref, w2_ref, b2_ref, w3_ref, b3_ref, oT_ref,
               *, mxu_dtype=jnp.bfloat16):
    # x arrives untransposed (tile, in_dim); transpose in-kernel so every
    # intermediate and the output store carry the batch on the 128-wide lane
    # axis (lane-dense, unmasked stores).
    xT = x_ref[...].T.astype(mxu_dtype)                         # (in, tile)
    # fc1 + tanh: MXU matmul, f32 accumulation; bias add + tanh in f32 (EUP).
    h1 = jnp.tanh(
        jnp.dot(w1_ref[...].astype(mxu_dtype), xT,
                preferred_element_type=jnp.float32) + b1_ref[...])
    # fc2 + tanh
    h2 = jnp.tanh(
        jnp.dot(w2_ref[...].astype(mxu_dtype), h1.astype(mxu_dtype),
                preferred_element_type=jnp.float32) + b2_ref[...])
    # fc3 (no activation) -> lane-dense (out_dim, tile) store.
    oT_ref[...] = (
        jnp.dot(w3_ref[...].astype(mxu_dtype), h2.astype(mxu_dtype),
                preferred_element_type=jnp.float32) + b3_ref[...]
    ).astype(oT_ref.dtype)


def _choose_tile(B, in_dim, out_dim, batch_tile, *,
                 vmem_budget_bytes=20 * 1024 * 1024, min_grid_steps=2):
    """Pick a lane-multiple batch tile.

    Large enough to amortize the ~0.35 us per-grid-step overhead, but capped so
    (a) the grid keeps >= min_grid_steps parallel steps (v7x has 2 TensorCores)
    when the batch allows, and (b) the per-step VMEM working set stays well
    inside v7x's 64 MiB physical / 32 MiB scoped VMEM.
    """
    tile = _round_up(min(max(batch_tile, 128), max(B, 1)), 128)
    if B >= min_grid_steps * 128:
        tile = min(tile, _round_up(pl.cdiv(B, min_grid_steps), 128))
    # Per-batch-column f32 bytes: double-buffered lane-padded x block (in_dim
    # pads to 128 lanes), double-buffered output block, in-kernel transposed
    # x copy, and the f32 hidden activations.
    per_col = 4 * (2 * _round_up(in_dim, 128)
                   + 2 * _round_up(out_dim, 8)
                   + _round_up(in_dim, 8)
                   + 64 + 32 + _round_up(out_dim, 8))
    vmem_tile = max(128, (vmem_budget_bytes // per_col) // 128 * 128)
    return max(128, min(tile, vmem_tile))


def fnn_forward(x, params, *, batch_tile=8192, mxu_dtype=jnp.bfloat16):
    """Fused FNN forward: tanh(fc1) -> tanh(fc2) -> fc3.

    x: (B, input_size) float32, fed to the kernel untransposed and unpadded.
    params (PyTorch-native layout): w1 (64, in), b1 (64, 1), w2 (32, 64),
        b2 (32, 1), w3 (out, 32), b3 (out, 1).
    Returns (B, output_size) float32.
    """
    B, in_dim = x.shape
    h1_dim = params["w1"].shape[0]
    h2_dim = params["w2"].shape[0]
    out_dim = params["w3"].shape[0]

    tile = _choose_tile(B, in_dim, out_dim, batch_tile)
    grid = (pl.cdiv(B, tile),)
    b_cover = grid[0] * tile  # batch coverage including the ragged tail block

    # Weights / biases are tiny and fully resident across the grid: constant
    # index_map -> a single DMA, never refetched while the batch streams.
    def resident(shape):
        return pl.BlockSpec(shape, lambda i: (0, 0))

    flops = 2 * b_cover * (in_dim * h1_dim + h1_dim * h2_dim + h2_dim * out_dim)
    bytes_accessed = 4 * (
        b_cover * (in_dim + out_dim)
        + in_dim * h1_dim + h1_dim * h2_dim + h2_dim * out_dim
        + h1_dim + h2_dim + out_dim)

    oT = pl.pallas_call(
        functools.partial(fnn_kernel, mxu_dtype=mxu_dtype),
        out_shape=jax.ShapeDtypeStruct((out_dim, B), jnp.float32),
        grid_spec=pltpu.PrefetchScalarGridSpec(
            num_scalar_prefetch=0,
            grid=grid,
            in_specs=[
                # x streamed untransposed; the ragged last block reads
                # out-of-bounds rows (undefined) whose batch columns never mix
                # with valid ones, and whose output writes Pallas drops.
                pl.BlockSpec((tile, in_dim), lambda i: (i, 0)),
                resident((h1_dim, in_dim)),    # w1
                resident((h1_dim, 1)),         # b1
                resident((h2_dim, h1_dim)),    # w2
                resident((h2_dim, 1)),         # b2
                resident((out_dim, h2_dim)),   # w3
                resident((out_dim, 1)),        # b3
            ],
            out_specs=pl.BlockSpec((out_dim, tile), lambda i: (0, i)),
        ),
        compiler_params=pltpu.CompilerParams(
            dimension_semantics=("parallel",),
            vmem_limit_bytes=32 * 1024 * 1024,
        ),
        cost_estimate=pl.CostEstimate(
            flops=flops,
            transcendentals=b_cover * (h1_dim + h2_dim),
            bytes_accessed=bytes_accessed,
        ),
    )(x, params["w1"], params["b1"], params["w2"], params["b2"],
      params["w3"], params["b3"])

    # (out_dim, B) -> (B, out_dim): tiny wrapper transpose (out_dim << 128),
    # kept outside so the in-kernel store stays lane-dense / unmasked.
    return oT.T


def init_params(key, input_size, output_size):
    """Deterministic init matching the PyTorch FNN layer shapes.

    nn.Linear default init is U(-1/sqrt(fan_in), 1/sqrt(fan_in)); weights are
    stored PyTorch-native as (out_features, in_features), biases as (out, 1).
    """
    dims = [(input_size, 64), (64, 32), (32, output_size)]
    params = {}
    for idx, (fan_in, fan_out) in enumerate(dims, start=1):
        key, kw, kb = jax.random.split(key, 3)
        bound = 1.0 / jnp.sqrt(jnp.float32(fan_in))
        params[f"w{idx}"] = jax.random.uniform(
            kw, (fan_out, fan_in), jnp.float32, -bound, bound)
        params[f"b{idx}"] = jax.random.uniform(
            kb, (fan_out, 1), jnp.float32, -bound, bound)
    return params


def fnn_reference(x, params):
    h1 = jnp.tanh(x @ params["w1"].T + params["b1"].T)
    h2 = jnp.tanh(h1 @ params["w2"].T + params["b2"].T)
    return h2 @ params["w3"].T + params["b3"].T


if __name__ == "__main__":
    key = jax.random.PRNGKey(0)
    input_size, output_size = 16, 4

    kp, kx1, kx2, kx3 = jax.random.split(key, 4)
    params = init_params(kp, input_size, output_size)

    # Small demo batch (one padded 128-lane tile), exact f32 MXU path.
    x1 = jax.random.normal(kx1, (8, input_size), jnp.float32)
    run_f32 = jax.jit(functools.partial(fnn_forward, mxu_dtype=jnp.float32))
    out1 = jax.block_until_ready(run_f32(x1, params))
    ref1 = fnn_reference(x1, params)
    assert out1.shape == (8, output_size)
    assert jnp.allclose(out1, ref1, atol=1e-5, rtol=1e-5), "mismatch (small)"

    # Ragged batch: 2-step parallel grid with an out-of-bounds tail block.
    x2 = jax.random.normal(kx2, (300, input_size), jnp.float32)
    out2 = jax.block_until_ready(run_f32(x2, params))
    ref2 = fnn_reference(x2, params)
    assert out2.shape == (300, output_size)
    assert jnp.allclose(out2, ref2, atol=1e-5, rtol=1e-5), "mismatch (ragged)"
    assert bool(jnp.all(jnp.isfinite(out2))), "non-finite values (ragged)"

    # Larger batch on the default bf16-MXU path (f32 accumulation).
    x3 = jax.random.normal(kx3, (4096, input_size), jnp.float32)
    run_bf16 = jax.jit(fnn_forward)
    out3 = jax.block_until_ready(run_bf16(x3, params))
    ref3 = fnn_reference(x3, params)
    assert out3.shape == (4096, output_size)
    assert jnp.allclose(out3, ref3, atol=5e-2, rtol=5e-2), "mismatch (bf16)"

    print("KERNEL_OK")
</pallas_src>

<mosaic_0001>
module attributes {stable_mosaic.version = 11 : i64} {
  func.func @fnn_kernel(%arg0: i32, %arg1: memref<128x16xf32, #tpu.memory_space<vmem>>, %arg2: memref<64x16xf32, #tpu.memory_space<vmem>>, %arg3: memref<64x1xf32, #tpu.memory_space<vmem>>, %arg4: memref<32x64xf32, #tpu.memory_space<vmem>>, %arg5: memref<32x1xf32, #tpu.memory_space<vmem>>, %arg6: memref<4x32xf32, #tpu.memory_space<vmem>>, %arg7: memref<4x1xf32, #tpu.memory_space<vmem>>, %arg8: memref<4x128xf32, #tpu.memory_space<vmem>>) attributes {dimension_semantics = [#tpu.dimension_semantics<parallel>], iteration_bounds = array<i64: 1>, scalar_prefetch = 0 : i64, scratch_operands = 0 : i64, tpu.core_type = #tpu.core_type<tc>, window_params = [{transform_indices = @transform_0, window_bounds = array<i64: 128, 16>}, {pipeline_mode = #tpu.pipeline_mode<synchronous>, transform_indices = @transform_1, window_bounds = array<i64: 64, 16>}, {pipeline_mode = #tpu.pipeline_mode<synchronous>, transform_indices = @transform_2, window_bounds = array<i64: 64, 1>}, {pipeline_mode = #tpu.pipeline_mode<synchronous>, transform_indices = @transform_3, window_bounds = array<i64: 32, 64>}, {pipeline_mode = #tpu.pipeline_mode<synchronous>, transform_indices = @transform_4, window_bounds = array<i64: 32, 1>}, {pipeline_mode = #tpu.pipeline_mode<synchronous>, transform_indices = @transform_5, window_bounds = array<i64: 4, 32>}, {pipeline_mode = #tpu.pipeline_mode<synchronous>, transform_indices = @transform_6, window_bounds = array<i64: 4, 1>}, {transform_indices = @transform_7, window_bounds = array<i64: 4, 128>}]} {
    %c0 = arith.constant 0 : index
    %c0_0 = arith.constant 0 : index
    %0 = vector.load %arg1[%c0, %c0_0] : memref<128x16xf32, #tpu.memory_space<vmem>>, vector<128x16xf32>
    %1 = tpu.transpose %0, [1, 0] : vector<128x16xf32> -> vector<16x128xf32>
    %c0_1 = arith.constant 0 : index
    %c0_2 = arith.constant 0 : index
    %2 = vector.load %arg2[%c0_1, %c0_2] : memref<64x16xf32, #tpu.memory_space<vmem>>, vector<64x16xf32>
    %cst = arith.constant dense<0.000000e+00> : vector<64x128xf32>
    %3 = tpu.matmul %2, %1, %cst {dimension_numbers = #tpu.dot_dimension_numbers<[1], [0], [0], [1], [0, 0, 1, 1], [], []>} : vector<64x16xf32>, vector<16x128xf32>, vector<64x128xf32> -> vector<64x128xf32>
    %c0_3 = arith.constant 0 : index
    %c0_4 = arith.constant 0 : index
    %4 = vector.load %arg3[%c0_3, %c0_4] : memref<64x1xf32, #tpu.memory_space<vmem>>, vector<64x1xf32>
    %5 = vector.broadcast %4 : vector<64x1xf32> to vector<64x128xf32>
    %6 = arith.addf %3, %5 : vector<64x128xf32>
    %7 = math.tanh %6 : vector<64x128xf32>
    %c0_5 = arith.constant 0 : index
    %c0_6 = arith.constant 0 : index
    %8 = vector.load %arg4[%c0_5, %c0_6] : memref<32x64xf32, #tpu.memory_space<vmem>>, vector<32x64xf32>
    %cst_7 = arith.constant dense<0.000000e+00> : vector<32x128xf32>
    %9 = tpu.matmul %8, %7, %cst_7 {dimension_numbers = #tpu.dot_dimension_numbers<[1], [0], [0], [1], [0, 0, 1, 1], [], []>} : vector<32x64xf32>, vector<64x128xf32>, vector<32x128xf32> -> vector<32x128xf32>
    %c0_8 = arith.constant 0 : index
    %c0_9 = arith.constant 0 : index
    %10 = vector.load %arg5[%c0_8, %c0_9] : memref<32x1xf32, #tpu.memory_space<vmem>>, vector<32x1xf32>
    %11 = vector.broadcast %10 : vector<32x1xf32> to vector<32x128xf32>
    %12 = arith.addf %9, %11 : vector<32x128xf32>
    %13 = math.tanh %12 : vector<32x128xf32>
    %c0_10 = arith.constant 0 : index
    %c0_11 = arith.constant 0 : index
    %14 = vector.load %arg6[%c0_10, %c0_11] : memref<4x32xf32, #tpu.memory_space<vmem>>, vector<4x32xf32>
    %cst_12 = arith.constant dense<0.000000e+00> : vector<4x128xf32>
    %15 = tpu.matmul %14, %13, %cst_12 {dimension_numbers = #tpu.dot_dimension_numbers<[1], [0], [0], [1], [0, 0, 1, 1], [], []>} : vector<4x32xf32>, vector<32x128xf32>, vector<4x128xf32> -> vector<4x128xf32>
    %c0_13 = arith.constant 0 : index
    %c0_14 = arith.constant 0 : index
    %16 = vector.load %arg7[%c0_13, %c0_14] : memref<4x1xf32, #tpu.memory_space<vmem>>, vector<4x1xf32>
    %17 = vector.broadcast %16 : vector<4x1xf32> to vector<4x128xf32>
    %18 = arith.addf %15, %17 : vector<4x128xf32>
    %c0_15 = arith.constant 0 : index
    %c0_16 = arith.constant 0 : index
    %19 = vector.load %arg8[%c0_15, %c0_16] : memref<4x128xf32, #tpu.memory_space<vmem>>, vector<4x128xf32>
    tpu.vector_store %arg8[%c0_15, %c0_16], %18 {strides = array<i32>} : memref<4x128xf32, #tpu.memory_space<vmem>>, vector<4x128xf32>,
    return
  }
  func.func @transform_0(%arg0: i32) -> (i32, i32) {
    %c0_i32 = arith.constant 0 : i32
    %c0_i32_0 = arith.constant 0 : i32
    return %arg0, %c0_i32 : i32, i32
  }
  func.func @transform_1(%arg0: i32) -> (i32, i32) {
    %c0_i32 = arith.constant 0 : i32
    %c0_i32_0 = arith.constant 0 : i32
    %c0_i32_1 = arith.constant 0 : i32
    return %c0_i32, %c0_i32_0 : i32, i32
  }
  func.func @transform_2(%arg0: i32) -> (i32, i32) {
    %c0_i32 = arith.constant 0 : i32
    %c0_i32_0 = arith.constant 0 : i32
    %c0_i32_1 = arith.constant 0 : i32
    return %c0_i32, %c0_i32_0 : i32, i32
  }
  func.func @transform_3(%arg0: i32) -> (i32, i32) {
    %c0_i32 = arith.constant 0 : i32
    %c0_i32_0 = arith.constant 0 : i32
    %c0_i32_1 = arith.constant 0 : i32
    return %c0_i32, %c0_i32_0 : i32, i32
  }
  func.func @transform_4(%arg0: i32) -> (i32, i32) {
    %c0_i32 = arith.constant 0 : i32
    %c0_i32_0 = arith.constant 0 : i32
    %c0_i32_1 = arith.constant 0 : i32
    return %c0_i32, %c0_i32_0 : i32, i32
  }
  func.func @transform_5(%arg0: i32) -> (i32, i32) {
    %c0_i32 = arith.constant 0 : i32
    %c0_i32_0 = arith.constant 0 : i32
    %c0_i32_1 = arith.constant 0 : i32
    return %c0_i32, %c0_i32_0 : i32, i32
  }
  func.func @transform_6(%arg0: i32) -> (i32, i32) {
    %c0_i32 = arith.constant 0 : i32
    %c0_i32_0 = arith.constant 0 : i32
    %c0_i32_1 = arith.constant 0 : i32
    return %c0_i32, %c0_i32_0 : i32, i32
  }
  func.func @transform_7(%arg0: i32) -> (i32, i32) {
    %c0_i32 = arith.constant 0 : i32
    %c0_i32_0 = arith.constant 0 : i32
    return %c0_i32, %arg0 : i32, i32
  }
}

</mosaic_0001>

<llo_original>
// kernel: fnn_forward.1
$region0: #{fnn_forward.1}
  #allocation0 [shape = 'u32[]', space=smem, size = 0x4, offset = 0x4, fixed_abs, tag = 'smem constant byte address 0x4 - core index']
  #allocation1 [shape = 'u32[144,128]{1,0:T(1,128)}', space=vmem, size = 0x12000, scoped, tag = 'internal scratch']
  %s0 = inlined_call_operand.vmem [shape: f32[8,16], index: 0, kind: input, shape index: {}]
  %s1 = inlined_call_operand.vmem [shape: f32[64,16], index: 1, kind: input, shape index: {}]
  %s2 = inlined_call_operand.vmem [shape: f32[64,1], index: 2, kind: input, shape index: {}]
  %s3 = inlined_call_operand.vmem [shape: f32[32,64], index: 3, kind: input, shape index: {}]
  %s4 = inlined_call_operand.vmem [shape: f32[32,1], index: 4, kind: input, shape index: {}]
  %s5 = inlined_call_operand.vmem [shape: f32[4,32], index: 5, kind: input, shape index: {}]
  %s6 = inlined_call_operand.vmem [shape: f32[4,1], index: 6, kind: input, shape index: {}]
  %s7 = inlined_call_operand.hbm [shape: f32[4,8], index: 7, kind: output, shape index: {}]
  %s8 = sld [smem:[#allocation0]]
  $region38: #{fnn_forward.1} parent=0
    _
  %s10 = ssub.s32 1, %s8
  %s11 = scalar_select 0, %s10, %s8
  $region1: #{fnn_forward.1} parent=0
    #allocation2 [shape = 'u8[2048]{0}', space=vmem, size = 0x800, scoped, tag = 'output window, operand 0, single buffered']
    #allocation3 [shape = 's32[1]{0}', space=sflag, size = 0x4, scoped, tag = 'scoped memory for fnn_forward.1']
    %12 = vsyncpa [#allocation3], 0
    // Predicated region
    $region2: #{fnn_forward.1} parent=1 // pred_check
      _
    $region3: #{fnn_forward.1} parent=1 // pred_check_branch
      %14 = sbr.rel (0) target = $region5
    $region4: #{fnn_forward.1} parent=1 // pred_region
      _
    $region5: #{fnn_forward.1} parent=1 // pred_fallthru
      _
    // Predicated region
    $region6: #{fnn_forward.1} parent=1 // pred_check
      _
    $region7: #{fnn_forward.1} parent=1 // pred_check_branch
      %16 = sbr.rel (0) target = $region9
    $region8: #{fnn_forward.1} parent=1 // pred_region
      _
    $region9: #{fnn_forward.1} parent=1 // pred_fallthru
      _
    // Predicated region
    $region10: #{fnn_forward.1} parent=1 // pred_check
      _
    $region11: #{fnn_forward.1} parent=1 // pred_check_branch
      %18 = sbr.rel (0) target = $region13
    $region12: #{fnn_forward.1} parent=1 // pred_region
      _
    $region13: #{fnn_forward.1} parent=1 // pred_fallthru
      _
    // Predicated region
    $region14: #{fnn_forward.1} parent=1 // pred_check
      _
    $region15: #{fnn_forward.1} parent=1 // pred_check_branch
      %20 = sbr.rel (0) target = $region17
    $region16: #{fnn_forward.1} parent=1 // pred_region
      _
    $region17: #{fnn_forward.1} parent=1 // pred_fallthru
      _
    // Predicated region
    $region18: #{fnn_forward.1} parent=1 // pred_check
      _
    $region19: #{fnn_forward.1} parent=1 // pred_check_branch
      %22 = sbr.rel (0) target = $region21
    $region20: #{fnn_forward.1} parent=1 // pred_region
      _
    $region21: #{fnn_forward.1} parent=1 // pred_fallthru
      _
    // Predicated region
    $region22: #{fnn_forward.1} parent=1 // pred_check
      _
    $region23: #{fnn_forward.1} parent=1 // pred_check_branch
      %24 = sbr.rel (0) target = $region25
    $region24: #{fnn_forward.1} parent=1 // pred_region
      _
    $region25: #{fnn_forward.1} parent=1 // pred_fallthru
      _
    // Predicated region
    $region26: #{fnn_forward.1} parent=1 // pred_check
      _
    $region27: #{fnn_forward.1} parent=1 // pred_check_branch
      %26 = sbr.rel (0) target = $region29
    $region28: #{fnn_forward.1} parent=1 // pred_region
      _
    $region29: #{fnn_forward.1} parent=1 // pred_fallthru
      _
    %v27 = vld [vmem:[%s0] sm:$0xff]
    %v28 = vld [vmem:[%s0 + $0x8] sm:$0xff]
    %v29 = vld [vmem:[%s0 + $0x10] sm:$0xff]
    %v30 = vld [vmem:[%s0 + $0x18] sm:$0xff]
    %v31 = vld [vmem:[%s0 + $0x20] sm:$0xff]
    %v32 = vld [vmem:[%s0 + $0x28] sm:$0xff]
    %v33 = vld [vmem:[%s0 + $0x30] sm:$0xff]
    %v34 = vld [vmem:[%s0 + $0x38] sm:$0xff]
    %v35 = vld [vmem:[%s0 + $0x40] sm:$0xff]
    %v36 = vld [vmem:[%s0 + $0x48] sm:$0xff]
    %v37 = vld [vmem:[%s0 + $0x50] sm:$0xff]
    %v38 = vld [vmem:[%s0 + $0x58] sm:$0xff]
    %v39 = vld [vmem:[%s0 + $0x60] sm:$0xff]
    %v40 = vld [vmem:[%s0 + $0x68] sm:$0xff]
    %v41 = vld [vmem:[%s0 + $0x70] sm:$0xff]
    %v42 = vld [vmem:[%s0 + $0x78] sm:$0xff]
    %v43 = vld [vmem:[%s1] sm:$0xff]
    %v44 = vld [vmem:[%s1 + $0x8] sm:$0xff]
    %v45 = vld [vmem:[%s1 + $0x10] sm:$0xff]
    %v46 = vld [vmem:[%s1 + $0x18] sm:$0xff]
    %v47 = vld [vmem:[%s1 + $0x20] sm:$0xff]
    %v48 = vld [vmem:[%s1 + $0x28] sm:$0xff]
    %v49 = vld [vmem:[%s1 + $0x30] sm:$0xff]
    %v50 = vld [vmem:[%s1 + $0x38] sm:$0xff]
    %v51 = vld [vmem:[%s2] sm:$0xff]
    %v52 = vld [vmem:[%s2 + $0x8] sm:$0xff]
    %v53 = vld [vmem:[%s2 + $0x10] sm:$0xff]
    %v54 = vld [vmem:[%s2 + $0x18] sm:$0xff]
    %v55 = vld [vmem:[%s2 + $0x20] sm:$0xff]
    %v56 = vld [vmem:[%s2 + $0x28] sm:$0xff]
    %v57 = vld [vmem:[%s2 + $0x30] sm:$0xff]
    %v58 = vld [vmem:[%s2 + $0x38] sm:$0xff]
    %60 = vset.pattern.permute.xlu0 0
    %61 = vperm.xlu0 %60, %v51
    %v62 = vpop.permute.xlu0 %61
    %65 = vset.pattern.permute.xlu0 0
    %66 = vperm.xlu0 %65, %v52
    %v67 = vpop.permute.xlu0 %66
    %70 = vset.pattern.permute.xlu0 0
    %71 = vperm.xlu0 %70, %v53
    %v72 = vpop.permute.xlu0 %71
    %75 = vset.pattern.permute.xlu0 0
    %76 = vperm.xlu0 %75, %v54
    %v77 = vpop.permute.xlu0 %76
    %80 = vset.pattern.permute.xlu0 0
    %81 = vperm.xlu0 %80, %v55
    %v82 = vpop.permute.xlu0 %81
    %85 = vset.pattern.permute.xlu0 0
    %86 = vperm.xlu0 %85, %v56
    %v87 = vpop.permute.xlu0 %86
    %90 = vset.pattern.permute.xlu0 0
    %91 = vperm.xlu0 %90, %v57
    %v92 = vpop.permute.xlu0 %91
    %95 = vset.pattern.permute.xlu0 0
    %96 = vperm.xlu0 %95, %v58
    %v97 = vpop.permute.xlu0 %96
    %vm99 = vcmask 130048
    %v101 = vsel %vm99, %v43, 0
    %v104 = vsel %vm99, %v44, 0
    %v107 = vsel %vm99, %v45, 0
    %v110 = vsel %vm99, %v46, 0
    %v113 = vsel %vm99, %v47, 0
    %v116 = vsel %vm99, %v48, 0
    %v119 = vsel %vm99, %v49, 0
    %v122 = vsel %vm99, %v50, 0
    %v125 = vsel %vm99, %v27, 0
    %v128 = vsel %vm99, %v28, 0
    %v131 = vsel %vm99, %v29, 0
    %v134 = vsel %vm99, %v30, 0
    %v137 = vsel %vm99, %v31, 0
    %v140 = vsel %vm99, %v32, 0
    %v143 = vsel %vm99, %v33, 0
    %v146 = vsel %vm99, %v34, 0
    %v149 = vsel %vm99, %v35, 0
    %v152 = vsel %vm99, %v36, 0
    %v155 = vsel %vm99, %v37, 0
    %v158 = vsel %vm99, %v38, 0
    %v161 = vsel %vm99, %v39, 0
    %v164 = vsel %vm99, %v40, 0
    %v167 = vsel %vm99, %v41, 0
    %v170 = vsel %vm99, %v42, 0
    %172 = vmatprep.subr.mxu0 0.0
    %173 = vmatpush1.xpose.msra.mxu0 %v125
    %174 = vmatprep.subr.mxu0 0.0
    %175 = vmatpush1.xpose.msra.mxu0 %v128
    %176 = vmatprep.subr.mxu0 0.0
    %177 = vmatpush1.xpose.msra.mxu0 %v131
    %178 = vmatprep.subr.mxu0 0.0
    %179 = vmatpush1.xpose.msra.mxu0 %v134
    %180 = vmatprep.subr.mxu0 0.0
    %181 = vmatpush1.xpose.msra.mxu0 %v137
    %182 = vmatprep.subr.mxu0 0.0
    %183 = vmatpush1.xpose.msra.mxu0 %v140
    %184 = vmatprep.subr.mxu0 0.0
    %185 = vmatpush1.xpose.msra.mxu0 %v143
    %186 = vmatprep.subr.mxu0 0.0
    %187 = vmatpush1.xpose.msra.mxu0 %v146
    %188 = vmatprep.subr.mxu0 0.0
    %189 = vmatpush1.xpose.msra.mxu0 %v149
    %190 = vmatprep.subr.mxu0 0.0
    %191 = vmatpush1.xpose.msra.mxu0 %v152
    %192 = vmatprep.subr.mxu0 0.0
    %193 = vmatpush1.xpose.msra.mxu0 %v155
    %194 = vmatprep.subr.mxu0 0.0
    %195 = vmatpush1.xpose.msra.mxu0 %v158
    %196 = vmatprep.subr.mxu0 0.0
    %197 = vmatpush1.xpose.msra.mxu0 %v161
    %198 = vmatprep.subr.mxu0 0.0
    %199 = vmatpush1.xpose.msra.mxu0 %v164
    %200 = vmatprep.subr.mxu0 0.0
    %201 = vmatpush1.xpose.msra.mxu0 %v167
    %202 = vmatprep.subr.mxu0 0.0
    %203 = vmatpush1.xpose.msra.mxu0 %v170
    %204 = vmatprep.subr.mxu0 0.0
    %205 = vmatpush1.xpose.msra.mxu0 0.0
    %206 = vmatprep.subr.mxu0 0.0
    %207 = vmatpush1.xpose.msra.mxu0 0.0
    %208 = vmatprep.subr.mxu0 0.0
    %209 = vmatpush1.xpose.msra.mxu0 0.0
    %210 = vmatprep.subr.mxu0 0.0
    %211 = vmatpush1.xpose.msra.mxu0 0.0
    %212 = vmatprep.subr.mxu0 0.0
    %213 = vmatpush1.xpose.msra.mxu0 0.0
    %214 = vmatprep.subr.mxu0 0.0
    %215 = vmatpush1.xpose.msra.mxu0 0.0
    %216 = vmatprep.subr.mxu0 0.0
    %217 = vmatpush1.xpose.msra.mxu0 0.0
    %218 = vmatprep.subr.mxu0 0.0
    %219 = vmatpush1.xpose.msra.mxu0 0.0
    %220 = vmatprep.subr.mxu0 0.0
    %221 = vmatpush1.xpose.msra.mxu0 0.0
    %222 = vmatprep.subr.mxu0 0.0
    %223 = vmatpush1.xpose.msra.mxu0 0.0
    %224 = vmatprep.subr.mxu0 0.0
    %225 = vmatpush1.xpose.msra.mxu0 0.0
    %226 = vmatprep.subr.mxu0 0.0
    %227 = vmatpush1.xpose.msra.mxu0 0.0
    %228 = vmatprep.subr.mxu0 0.0
    %229 = vmatpush1.xpose.msra.mxu0 0.0
    %230 = vmatprep.subr.mxu0 0.0
    %231 = vmatpush1.xpose.msra.mxu0 0.0
    %232 = vmatprep.subr.mxu0 0.0
    %233 = vmatpush1.xpose.msra.mxu0 0.0
    %234 = vmatprep.subr.mxu0 0.0
    %235 = vmatpush1.xpose.msra.mxu0 0.0
    %236 = vmatprep.mubr.f32.mxu0 0.0
    %237 = vmatmul.mubr.f32.gmra.mrb[0].mxu0 %v101
    %v238 = vpop.f32.mrb[0].mxu0
    %v239 = vadd.f32 %v62, %v238
    %v240 = vpop.f32.mrb[0].mxu0
    %241 = vmatprep.mubr.f32.mxu0 0.0
    %242 = vmatmul.mubr.f32.gmra.mrb[0].mxu0 %v104
    %v243 = vpop.f32.mrb[0].mxu0
    %v244 = vadd.f32 %v67, %v243
    %v245 = vpop.f32.mrb[0].mxu0
    %246 = vmatprep.mubr.f32.mxu0 0.0
    %247 = vmatmul.mubr.f32.gmra.mrb[0].mxu0 %v107
    %v248 = vpop.f32.mrb[0].mxu0
    %v249 = vadd.f32 %v72, %v248
    %v250 = vpop.f32.mrb[0].mxu0
    %251 = vmatprep.mubr.f32.mxu0 0.0
    %252 = vmatmul.mubr.f32.gmra.mrb[0].mxu0 %v110
    %v253 = vpop.f32.mrb[0].mxu0
    %v254 = vadd.f32 %v77, %v253
    %v255 = vpop.f32.mrb[0].mxu0
    %256 = vmatprep.mubr.f32.mxu0 0.0
    %257 = vmatmul.mubr.f32.gmra.mrb[0].mxu0 %v113
    %v258 = vpop.f32.mrb[0].mxu0
    %v259 = vadd.f32 %v82, %v258
    %v260 = vpop.f32.mrb[0].mxu0
    %261 = vmatprep.mubr.f32.mxu0 0.0
    %262 = vmatmul.mubr.f32.gmra.mrb[0].mxu0 %v116
    %v263 = vpop.f32.mrb[0].mxu0
    %v264 = vadd.f32 %v87, %v263
    %v265 = vpop.f32.mrb[0].mxu0
    %266 = vmatprep.mubr.f32.mxu0 0.0
    %267 = vmatmul.mubr.f32.gmra.mrb[0].mxu0 %v119
    %v268 = vpop.f32.mrb[0].mxu0
    %v269 = vadd.f32 %v92, %v268
    %v270 = vpop.f32.mrb[0].mxu0
    %271 = vmatprep.mubr.f32.mxu0 0.0
    %272 = vmatmul.mubr.f32.gmra.mrb[0].mxu0 %v122
    %v273 = vpop.f32.mrb[0].mxu0
    %v274 = vadd.f32 %v97, %v273
    %v275 = vpop.f32.mrb[0].mxu0
    %276 = vdwg.mxu0
    %v277 = vtanh.pop %v239
    %v278 = vtanh.pop %v244
    %v279 = vtanh.pop %v249
    %v280 = vtanh.pop %v254
    %v281 = vtanh.pop %v259
    %v282 = vtanh.pop %v264
    %v283 = vtanh.pop %v269
    %v284 = vtanh.pop %v274
    %v285 = vld [vmem:[%s3] sm:$0xff]
    %v286 = vld [vmem:[%s3 + $0x8] sm:$0xff]
    %v287 = vld [vmem:[%s3 + $0x10] sm:$0xff]
    %v288 = vld [vmem:[%s3 + $0x18] sm:$0xff]
    %v289 = vld [vmem:[%s4] sm:$0xff]
    %v290 = vld [vmem:[%s4 + $0x8] sm:$0xff]
    %v291 = vld [vmem:[%s4 + $0x10] sm:$0xff]
    %v292 = vld [vmem:[%s4 + $0x18] sm:$0xff]
    %294 = vset.pattern.permute.xlu0 0
    %295 = vperm.xlu0 %294, %v289
    %v296 = vpop.permute.xlu0 %295
    %299 = vset.pattern.permute.xlu0 0
    %300 = vperm.xlu0 %299, %v290
    %v301 = vpop.permute.xlu0 %300
    %304 = vset.pattern.permute.xlu0 0
    %305 = vperm.xlu0 %304, %v291
    %v306 = vpop.permute.xlu0 %305
    %309 = vset.pattern.permute.xlu0 0
    %310 = vperm.xlu0 %309, %v292
    %v311 = vpop.permute.xlu0 %310
    %vm313 = vcmask 523264
    %v315 = vsel %vm313, %v285, 0
    %v318 = vsel %vm313, %v286, 0
    %v321 = vsel %vm313, %v287, 0
    %v324 = vsel %vm313, %v288, 0
    %326 = vmatprep.subr.mxu0 0.0
    %327 = vmatpush1.msra.mxu0 %v277
    %328 = vmatprep.subr.mxu0 0.0
    %329 = vmatpush1.msra.mxu0 %v278
    %330 = vmatprep.subr.mxu0 0.0
    %331 = vmatpush1.msra.mxu0 %v279
    %332 = vmatprep.subr.mxu0 0.0
    %333 = vmatpush1.msra.mxu0 %v280
    %334 = vmatprep.subr.mxu0 0.0
    %335 = vmatpush1.msra.mxu0 %v281
    %336 = vmatprep.subr.mxu0 0.0
    %337 = vmatpush1.msra.mxu0 %v282
    %338 = vmatprep.subr.mxu0 0.0
    %339 = vmatpush1.msra.mxu0 %v283
    %340 = vmatprep.subr.mxu0 0.0
    %341 = vmatpush1.msra.mxu0 %v284
    %342 = vmatprep.subr.mxu0 0.0
    %343 = vmatpush1.msra.mxu0 0.0
    %344 = vmatprep.subr.mxu0 0.0
    %345 = vmatpush1.msra.mxu0 0.0
    %346 = vmatprep.subr.mxu0 0.0
    %347 = vmatpush1.msra.mxu0 0.0
    %348 = vmatprep.subr.mxu0 0.0
    %349 = vmatpush1.msra.mxu0 0.0
    %350 = vmatprep.subr.mxu0 0.0
    %351 = vmatpush1.msra.mxu0 0.0
    %352 = vmatprep.subr.mxu0 0.0
    %353 = vmatpush1.msra.mxu0 0.0
    %354 = vmatprep.subr.mxu0 0.0
    %355 = vmatpush1.msra.mxu0 0.0
    %356 = vmatprep.subr.mxu0 0.0
    %357 = vmatpush1.msra.mxu0 0.0
    %358 = vmatprep.subr.mxu0 0.0
    %359 = vmatpush1.msra.mxu0 0.0
    %360 = vmatprep.subr.mxu0 0.0
    %361 = vmatpush1.msra.mxu0 0.0
    %362 = vmatprep.subr.mxu0 0.0
    %363 = vmatpush1.msra.mxu0 0.0
    %364 = vmatprep.subr.mxu0 0.0
    %365 = vmatpush1.msra.mxu0 0.0
    %366 = vmatprep.subr.mxu0 0.0
    %367 = vmatpush1.msra.mxu0 0.0
    %368 = vmatprep.subr.mxu0 0.0
    %369 = vmatpush1.msra.mxu0 0.0
    %370 = vmatprep.subr.mxu0 0.0
    %371 = vmatpush1.msra.mxu0 0.0
    %372 = vmatprep.subr.mxu0 0.0
    %373 = vmatpush1.msra.mxu0 0.0
    %374 = vmatprep.subr.mxu0 0.0
    %375 = vmatpush1.msra.mxu0 0.0
    %376 = vmatprep.subr.mxu0 0.0
    %377 = vmatpush1.msra.mxu0 0.0
    %378 = vmatprep.subr.mxu0 0.0
    %379 = vmatpush1.msra.mxu0 0.0
    %380 = vmatprep.subr.mxu0 0.0
    %381 = vmatpush1.msra.mxu0 0.0
    %382 = vmatprep.subr.mxu0 0.0
    %383 = vmatpush1.msra.mxu0 0.0
    %384 = vmatprep.subr.mxu0 0.0
    %385 = vmatpush1.msra.mxu0 0.0
    %386 = vmatprep.subr.mxu0 0.0
    %387 = vmatpush1.msra.mxu0 0.0
    %388 = vmatprep.subr.mxu0 0.0
    %389 = vmatpush1.msra.mxu0 0.0
    %390 = vmatprep.mubr.f32.mxu0 0.0
    %391 = vmatmul.mubr.f32.gmra.mrb[0].mxu0 %v315
    %v392 = vpop.f32.mrb[0].mxu0
    %v393 = vadd.f32 %v296, %v392
    %v394 = vpop.f32.mrb[0].mxu0
    %395 = vmatprep.mubr.f32.mxu0 0.0
    %396 = vmatmul.mubr.f32.gmra.mrb[0].mxu0 %v318
    %v397 = vpop.f32.mrb[0].mxu0
    %v398 = vadd.f32 %v301, %v397
    %v399 = vpop.f32.mrb[0].mxu0
    %400 = vmatprep.mubr.f32.mxu0 0.0
    %401 = vmatmul.mubr.f32.gmra.mrb[0].mxu0 %v321
    %v402 = vpop.f32.mrb[0].mxu0
    %v403 = vadd.f32 %v306, %v402
    %v404 = vpop.f32.mrb[0].mxu0
    %405 = vmatprep.mubr.f32.mxu0 0.0
    %406 = vmatmul.mubr.f32.gmra.mrb[0].mxu0 %v324
    %v407 = vpop.f32.mrb[0].mxu0
    %v408 = vadd.f32 %v311, %v407
    %v409 = vpop.f32.mrb[0].mxu0
    %410 = vdwg.mxu0
    %v411 = vtanh.pop %v393
    %v412 = vtanh.pop %v398
    %v413 = vtanh.pop %v403
    %v414 = vtanh.pop %v408
    %v415 = vld [vmem:[%s5] sm:$0xf]
    %v416 = vld [vmem:[%s6] sm:$0xf]
    %418 = vset.pattern.permute.xlu0 0
    %419 = vperm.xlu0 %418, %v416
    %v420 = vpop.permute.xlu0 %419
    %vm422 = vcmask 261120
    %v424 = vsel %vm422, %v415, 0
    %426 = vmatprep.subr.mxu0 0.0
    %427 = vmatpush1.msra.mxu0 %v411
    %428 = vmatprep.subr.mxu0 0.0
    %429 = vmatpush1.msra.mxu0 %v412
    %430 = vmatprep.subr.mxu0 0.0
    %431 = vmatpush1.msra.mxu0 %v413
    %432 = vmatprep.subr.mxu0 0.0
    %433 = vmatpush1.msra.mxu0 %v414
    %434 = vmatprep.subr.mxu0 0.0
    %435 = vmatpush1.msra.mxu0 0.0
    %436 = vmatprep.subr.mxu0 0.0
    %437 = vmatpush1.msra.mxu0 0.0
    %438 = vmatprep.subr.mxu0 0.0
    %439 = vmatpush1.msra.mxu0 0.0
    %440 = vmatprep.subr.mxu0 0.0
    %441 = vmatpush1.msra.mxu0 0.0
    %442 = vmatprep.subr.mxu0 0.0
    %443 = vmatpush1.msra.mxu0 0.0
    %444 = vmatprep.subr.mxu0 0.0
    %445 = vmatpush1.msra.mxu0 0.0
    %446 = vmatprep.subr.mxu0 0.0
    %447 = vmatpush1.msra.mxu0 0.0
    %448 = vmatprep.subr.mxu0 0.0
    %449 = vmatpush1.msra.mxu0 0.0
    %450 = vmatprep.subr.mxu0 0.0
    %451 = vmatpush1.msra.mxu0 0.0
    %452 = vmatprep.subr.mxu0 0.0
    %453 = vmatpush1.msra.mxu0 0.0
    %454 = vmatprep.subr.mxu0 0.0
    %455 = vmatpush1.msra.mxu0 0.0
    %456 = vmatprep.subr.mxu0 0.0
    %457 = vmatpush1.msra.mxu0 0.0
    %458 = vmatprep.subr.mxu0 0.0
    %459 = vmatpush1.msra.mxu0 0.0
    %460 = vmatprep.subr.mxu0 0.0
    %461 = vmatpush1.msra.mxu0 0.0
    %462 = vmatprep.subr.mxu0 0.0
    %463 = vmatpush1.msra.mxu0 0.0
    %464 = vmatprep.subr.mxu0 0.0
    %465 = vmatpush1.msra.mxu0 0.0
    %466 = vmatprep.subr.mxu0 0.0
    %467 = vmatpush1.msra.mxu0 0.0
    %468 = vmatprep.subr.mxu0 0.0
    %469 = vmatpush1.msra.mxu0 0.0
    %470 = vmatprep.subr.mxu0 0.0
    %471 = vmatpush1.msra.mxu0 0.0
    %472 = vmatprep.subr.mxu0 0.0
    %473 = vmatpush1.msra.mxu0 0.0
    %474 = vmatprep.subr.mxu0 0.0
    %475 = vmatpush1.msra.mxu0 0.0
    %476 = vmatprep.subr.mxu0 0.0
    %477 = vmatpush1.msra.mxu0 0.0
    %478 = vmatprep.subr.mxu0 0.0
    %479 = vmatpush1.msra.mxu0 0.0
    %480 = vmatprep.subr.mxu0 0.0
    %481 = vmatpush1.msra.mxu0 0.0
    %482 = vmatprep.subr.mxu0 0.0
    %483 = vmatpush1.msra.mxu0 0.0
    %484 = vmatprep.subr.mxu0 0.0
    %485 = vmatpush1.msra.mxu0 0.0
    %486 = vmatprep.subr.mxu0 0.0
    %487 = vmatpush1.msra.mxu0 0.0
    %488 = vmatprep.subr.mxu0 0.0
    %489 = vmatpush1.msra.mxu0 0.0
    %490 = vmatprep.mubr.f32.mxu0 0.0
    %491 = vmatmul.mubr.f32.gmra.mrb[0].mxu0 %v424
    %v492 = vpop.f32.mrb[0].mxu0
    %v493 = vadd.f32 %v420, %v492
    %v494 = vpop.f32.mrb[0].mxu0
    %495 = vdwg.mxu0
    %496 = vst [vmem:[#allocation2] sm:$0xf] %v493
    // Predicated region
    $region30: #{fnn_forward.1} parent=1 // pred_check
      _
    $region31: #{fnn_forward.1} parent=1 // pred_check_branch
      %498 = sbr.rel (0) target = $region33
    $region32: #{fnn_forward.1} parent=1 // pred_region
      %s500 = ssub.s32 64, 64
      %501 = vsyncadd [#allocation3], %s500
      %s503 = sshll.u32 [#allocation2], 4
      %s504 = int_to_ptr.vmem [resolvable:$true] %s503
      %506 = dma.vmem_to_hbm [thread:$0]  %s504, 64, %s7, [#allocation3]
    $region33: #{fnn_forward.1} parent=1 // pred_fallthru
      _
    // Predicated region
    $region34: #{fnn_forward.1} parent=1 // pred_check
      _
    $region35: #{fnn_forward.1} parent=1 // pred_check_branch
      %508 = sbr.rel (0) target = $region37
    $region36: #{fnn_forward.1} parent=1 // pred_region
      %509 = dma.done [#allocation3], 64
    $region37: #{fnn_forward.1} parent=1 // pred_fallthru
      _
    %510 = vsyncpa [#allocation3], 1

</llo_original>
